<compile_context>
chip_gen: v7x
topology: tpu7x:2x2x1
jax: 0.10.0
libtpu: 0.0.40
codegen_flags: <defaults>
</compile_context>

<pallas_src>
import functools

import jax
import jax.numpy as jnp
from jax.experimental import pallas as pl
from jax.experimental.pallas import tpu as pltpu

_SUBLANE = 8
_LANE = 128
_MAX_TILE = 512        # per-axis tile cap (multiple of 8 and 128)
_K_UNTILED_CAP = 1024  # reduction dim stays untiled up to this size
_K_TILE = 512


def _round_up(x: int, m: int) -> int:
    return ((x + m - 1) // m) * m


def _pick_tile(dim: int, align: int, cap: int = _MAX_TILE):
    """Balanced tile size (multiple of `align`, <= cap) and padded extent."""
    if dim <= cap:
        t = _round_up(dim, align)
        return t, t
    n_tiles = -(-dim // cap)                       # ceil(dim / cap)
    t = _round_up(-(-dim // n_tiles), align)       # balanced per-tile size
    return t, t * n_tiles


def _pick_k_tile(k: int):
    """Reduction dim: untiled while it fits comfortably, 512-wide otherwise."""
    if k <= _K_UNTILED_CAP:
        return k, k
    return _K_TILE, _round_up(k, _K_TILE)


def _pad_last2(a: jax.Array, target):
    """Zero-pad the last two dims of `a` up to `target` (no-op if aligned)."""
    pads = [(0, 0)] * (a.ndim - 2) + [
        (0, target[0] - a.shape[-2]),
        (0, target[1] - a.shape[-1]),
    ]
    if all(p == (0, 0) for p in pads):
        return a
    return jnp.pad(a, pads)


def _vmem_limit(tn: int, tk: int, tc: int, in_dtype, out_dtype) -> int:
    in_b = jnp.dtype(in_dtype).itemsize
    out_b = jnp.dtype(out_dtype).itemsize
    # 2x for double-buffering of each pipelined operand + output, plus acc.
    live = 2 * (tn * tk * in_b + tk * tc * in_b + tc * in_b + tn * tc * out_b)
    live += tn * tc * 4  # f32 accumulator scratch (worst case)
    # Generous headroom, clamped to stay inside v7x's 64 MiB per-TC VMEM.
    return int(min(max(2 * live, 16 * 2**20), 48 * 2**20))


# ---------------------------------------------------------------------------
# Kernels
# ---------------------------------------------------------------------------

def _matmul_bias_kernel(x_ref, w_ref, b_ref, o_ref):
    """Single-K-step: dot + bias, no scratch accumulator, no reduction axis."""
    # x_ref: (1, TN, K)  w_ref: (1, K, TC)  b_ref: (1, 1, TC)  o_ref: (1, TN, TC)
    acc = jnp.dot(x_ref[0], w_ref[0], preferred_element_type=jnp.float32)
    o_ref[0] = (acc + b_ref[0].astype(jnp.float32)).astype(o_ref.dtype)


def _matmul_bias_acc_kernel(x_ref, w_ref, b_ref, o_ref, acc_ref, *, k_axis):
    """K-tiled variant with an f32 VMEM accumulator."""
    k = pl.program_id(k_axis)
    nk = pl.num_programs(k_axis)

    @pl.when(k == 0)
    def _init():
        acc_ref[...] = jnp.zeros_like(acc_ref)

    acc_ref[...] += jnp.dot(x_ref[0], w_ref[0],
                            preferred_element_type=jnp.float32)

    @pl.when(k == nk - 1)
    def _finalize():
        o_ref[0] = (acc_ref[...] + b_ref[0].astype(jnp.float32)
                    ).astype(o_ref.dtype)


# ---------------------------------------------------------------------------
# Tiled driver shared by both input ranks
# ---------------------------------------------------------------------------

def _ensemble_matmul(x3, w3, b3, out_dtype, *, flops):
    """out[g] = x3[g] @ w3[g] + b3[g] for g in range(G), tiled on the MXU."""
    G, N, K = x3.shape
    C = w3.shape[2]

    tn, n_pad = _pick_tile(N, _SUBLANE)
    tc, c_pad = _pick_tile(C, _LANE)   # lane-dense output stores
    tk, k_pad = _pick_k_tile(K)

    x_p = _pad_last2(x3, (n_pad, k_pad))       # (G, n_pad, k_pad)
    w_p = _pad_last2(w3, (k_pad, c_pad))       # (G, k_pad, c_pad)
    b_p = _pad_last2(b3, (1, c_pad))           # (G, 1,     c_pad)

    nk = k_pad // tk
    bytes_accessed = (x3.size * x3.dtype.itemsize
                      + w3.size * w3.dtype.itemsize
                      + b3.size * b3.dtype.itemsize
                      + G * N * C * jnp.dtype(out_dtype).itemsize)
    common = dict(
        out_shape=jax.ShapeDtypeStruct((G, n_pad, c_pad), out_dtype),
        cost_estimate=pl.CostEstimate(flops=flops, transcendentals=0,
                                      bytes_accessed=bytes_accessed),
    )
    vmem = _vmem_limit(tn, tk, tc, x3.dtype, out_dtype)

    if nk == 1:
        # Fast path: no reduction axis, no accumulator scratch.
        out = pl.pallas_call(
            _matmul_bias_kernel,
            grid=(G, n_pad // tn, c_pad // tc),
            in_specs=[
                pl.BlockSpec((1, tn, tk), lambda g, i, j: (g, i, 0)),
                pl.BlockSpec((1, tk, tc), lambda g, i, j: (g, 0, j)),
                pl.BlockSpec((1, 1, tc), lambda g, i, j: (g, 0, j)),
            ],
            out_specs=pl.BlockSpec((1, tn, tc), lambda g, i, j: (g, i, j)),
            compiler_params=pltpu.CompilerParams(
                dimension_semantics=("parallel", "parallel", "parallel"),
                vmem_limit_bytes=vmem,
            ),
            **common,
        )(x_p, w_p, b_p)
    else:
        out = pl.pallas_call(
            functools.partial(_matmul_bias_acc_kernel, k_axis=3),
            grid=(G, n_pad // tn, c_pad // tc, nk),
            in_specs=[
                pl.BlockSpec((1, tn, tk), lambda g, i, j, k: (g, i, k)),
                pl.BlockSpec((1, tk, tc), lambda g, i, j, k: (g, k, j)),
                pl.BlockSpec((1, 1, tc), lambda g, i, j, k: (g, 0, j)),
            ],
            out_specs=pl.BlockSpec((1, tn, tc), lambda g, i, j, k: (g, i, j)),
            scratch_shapes=[pltpu.VMEM((tn, tc), jnp.float32)],
            compiler_params=pltpu.CompilerParams(
                dimension_semantics=("parallel", "parallel", "parallel",
                                     "arbitrary"),
                vmem_limit_bytes=vmem,
            ),
            **common,
        )(x_p, w_p, b_p)

    return out[:, :N, :C]


# ---------------------------------------------------------------------------
# Forward paths
# ---------------------------------------------------------------------------

def _forward_shared(x, weight, bias, out_dtype):
    """2-D x shared across ensemble: fold E into the lane axis -> one matmul."""
    N, K = x.shape
    E, _, D_out = weight.shape
    C = E * D_out

    # (E, K, D_out) -> (1, K, E*D_out): lane-dense fused weight / bias.
    w_f = jnp.transpose(weight, (1, 0, 2)).reshape(1, K, C)
    b_f = jnp.transpose(bias, (1, 0, 2)).reshape(1, 1, C)

    out = _ensemble_matmul(x[None], w_f, b_f, out_dtype,
                           flops=2 * N * K * C)[0]          # (N, E*D_out)
    return jnp.transpose(out.reshape(N, E, D_out), (1, 0, 2))


def _forward_per_member(x, weight, bias, out_dtype):
    """3-D x (per-member batch): grid over (E, N-tiles, C-tiles[, K-tiles])."""
    E, N, K = x.shape
    D_out = weight.shape[2]
    return _ensemble_matmul(x, weight, bias, out_dtype,
                            flops=2 * E * N * K * D_out)


def ensemble_linear(x: jax.Array, weight: jax.Array, bias: jax.Array,
                    *, compute_dtype=None) -> jax.Array:
    """Pallas forward for EnsembleLinear.

    x:      (N, D_in) shared across ensemble, or (E, N, D_in) per-member.
    weight: (E, D_in, D_out)
    bias:   (E, 1, D_out)
    returns (E, N, D_out) in x's original dtype.

    compute_dtype: optionally cast x / weight (e.g. jnp.bfloat16 on v6e/v7x)
    before the MXU; accumulation is always float32.
    """
    E, D_in, D_out = weight.shape
    out_dtype = x.dtype
    if compute_dtype is not None:
        x = x.astype(compute_dtype)
        weight = weight.astype(compute_dtype)

    if x.ndim == 2:
        assert x.shape[1] == D_in
        return _forward_shared(x, weight, bias, out_dtype)

    assert x.ndim == 3 and x.shape[0] == E and x.shape[2] == D_in
    return _forward_per_member(x, weight, bias, out_dtype)


def init_ensemble_linear_params(key, input_dim, output_dim, num_ensemble,
                                dtype=jnp.float32):
    """Matches the module init: trunc_normal_(std=1/(2*sqrt(D_in)), a=-2, b=2), zero bias."""
    std = 1.0 / (2.0 * input_dim ** 0.5)
    # torch.nn.init.trunc_normal_ truncates at ABSOLUTE [-2, 2]; in
    # standard-normal units that is +-2/std (effectively no truncation here).
    w = (jax.random.truncated_normal(
            key, -2.0 / std, 2.0 / std,
            (num_ensemble, input_dim, output_dim)) * std).astype(dtype)
    b = jnp.zeros((num_ensemble, 1, output_dim), dtype=dtype)
    return w, b
    # TODO(synk): load_save / update_save / get_decay_loss are parameter
    # bookkeeping, not forward compute; keep them as plain JAX outside kernels.


if __name__ == "__main__":
    key = jax.random.PRNGKey(0)
    k_w, k_x2, k_x2b, k_x3 = jax.random.split(key, 4)

    num_ensemble, input_dim, output_dim = 7, 32, 16
    weight, bias = init_ensemble_linear_params(k_w, input_dim, output_dim,
                                               num_ensemble)

    # Case 1: 2-D shared input -> single fused lane-dense matmul.
    x2 = jax.random.normal(k_x2, (8, input_dim), dtype=jnp.float32)
    out2 = ensemble_linear(x2, weight, bias)
    jax.block_until_ready(out2)
    ref2 = jnp.einsum("ij,bjk->bik", x2, weight) + bias
    assert out2.shape == (num_ensemble, 8, output_dim)
    assert jnp.allclose(out2, ref2, atol=1e-5, rtol=1e-5)

    # Case 2: 2-D shared input with N > tile (exercises balanced N tiling).
    x2b = jax.random.normal(k_x2b, (600, input_dim), dtype=jnp.float32)
    out2b = ensemble_linear(x2b, weight, bias)
    jax.block_until_ready(out2b)
    ref2b = jnp.einsum("ij,bjk->bik", x2b, weight) + bias
    assert out2b.shape == (num_ensemble, 600, output_dim)
    assert jnp.allclose(out2b, ref2b, atol=1e-5, rtol=1e-5)

    # Case 3: 3-D per-member input, unaligned N (exercises E grid + D_out pad).
    x3 = jax.random.normal(k_x3, (num_ensemble, 33, input_dim),
                           dtype=jnp.float32)
    out3 = ensemble_linear(x3, weight, bias)
    jax.block_until_ready(out3)
    ref3 = jnp.einsum("bij,bjk->bik", x3, weight) + bias
    assert out3.shape == (num_ensemble, 33, output_dim)
    assert jnp.allclose(out3, ref3, atol=1e-5, rtol=1e-5)

    print("KERNEL_OK")
</pallas_src>

<mosaic_0001>
module attributes {stable_mosaic.version = 11 : i64} {
  func.func @_matmul_bias_kernel(%arg0: i32, %arg1: i32, %arg2: i32, %arg3: memref<1x8x32xf32, #tpu.memory_space<vmem>>, %arg4: memref<1x32x128xf32, #tpu.memory_space<vmem>>, %arg5: memref<1x1x128xf32, #tpu.memory_space<vmem>>, %arg6: memref<1x8x128xf32, #tpu.memory_space<vmem>>) attributes {dimension_semantics = [#tpu.dimension_semantics<parallel>, #tpu.dimension_semantics<parallel>, #tpu.dimension_semantics<parallel>], iteration_bounds = array<i64: 1, 1, 1>, scalar_prefetch = 0 : i64, scratch_operands = 0 : i64, tpu.core_type = #tpu.core_type<tc>, window_params = [{transform_indices = @transform_0, window_bounds = array<i64: 1, 8, 32>}, {transform_indices = @transform_1, window_bounds = array<i64: 1, 32, 128>}, {transform_indices = @transform_2, window_bounds = array<i64: 1, 1, 128>}, {transform_indices = @transform_3, window_bounds = array<i64: 1, 8, 128>}]} {
    %c0 = arith.constant 0 : index
    %c0_0 = arith.constant 0 : index
    %c0_1 = arith.constant 0 : index
    %0 = vector.load %arg3[%c0, %c0_0, %c0_1] : memref<1x8x32xf32, #tpu.memory_space<vmem>>, vector<1x8x32xf32>
    %1 = vector.shape_cast %0 : vector<1x8x32xf32> to vector<8x32xf32>
    %c0_2 = arith.constant 0 : index
    %c0_3 = arith.constant 0 : index
    %c0_4 = arith.constant 0 : index
    %2 = vector.load %arg4[%c0_2, %c0_3, %c0_4] : memref<1x32x128xf32, #tpu.memory_space<vmem>>, vector<1x32x128xf32>
    %3 = vector.shape_cast %2 : vector<1x32x128xf32> to vector<32x128xf32>
    %cst = arith.constant dense<0.000000e+00> : vector<8x128xf32>
    %4 = tpu.matmul %1, %3, %cst {dimension_numbers = #tpu.dot_dimension_numbers<[1], [0], [0], [1], [0, 0, 1, 1], [], []>} : vector<8x32xf32>, vector<32x128xf32>, vector<8x128xf32> -> vector<8x128xf32>
    %c0_5 = arith.constant 0 : index
    %c0_6 = arith.constant 0 : index
    %c0_7 = arith.constant 0 : index
    %5 = vector.load %arg5[%c0_5, %c0_6, %c0_7] : memref<1x1x128xf32, #tpu.memory_space<vmem>>, vector<1x1x128xf32>
    %6 = vector.shape_cast %5 : vector<1x1x128xf32> to vector<1x128xf32>
    %7 = vector.broadcast %6 : vector<1x128xf32> to vector<8x128xf32>
    %8 = arith.addf %4, %7 : vector<8x128xf32>
    %c0_8 = arith.constant 0 : index
    %c0_9 = arith.constant 0 : index
    %c0_10 = arith.constant 0 : index
    %9 = vector.load %arg6[%c0_8, %c0_9, %c0_10] : memref<1x8x128xf32, #tpu.memory_space<vmem>>, vector<1x8x128xf32>
    %10 = vector.shape_cast %9 : vector<1x8x128xf32> to vector<8x128xf32>
    %11 = vector.shape_cast %8 : vector<8x128xf32> to vector<1x8x128xf32>
    tpu.vector_store %arg6[%c0_8, %c0_9, %c0_10], %11 {strides = array<i32>} : memref<1x8x128xf32, #tpu.memory_space<vmem>>, vector<1x8x128xf32>,
    return
  }
  func.func @transform_0(%arg0: i32, %arg1: i32, %arg2: i32) -> (i32, i32, i32) {
    %c0_i32 = arith.constant 0 : i32
    %c0_i32_0 = arith.constant 0 : i32
    return %arg0, %arg1, %c0_i32 : i32, i32, i32
  }
  func.func @transform_1(%arg0: i32, %arg1: i32, %arg2: i32) -> (i32, i32, i32) {
    %c0_i32 = arith.constant 0 : i32
    %c0_i32_0 = arith.constant 0 : i32
    return %arg0, %c0_i32, %arg2 : i32, i32, i32
  }
  func.func @transform_2(%arg0: i32, %arg1: i32, %arg2: i32) -> (i32, i32, i32) {
    %c0_i32 = arith.constant 0 : i32
    %c0_i32_0 = arith.constant 0 : i32
    return %arg0, %c0_i32, %arg2 : i32, i32, i32
  }
  func.func @transform_3(%arg0: i32, %arg1: i32, %arg2: i32) -> (i32, i32, i32) {
    %c0_i32 = arith.constant 0 : i32
    return %arg0, %arg1, %arg2 : i32, i32, i32
  }
}

</mosaic_0001>

<llo_original>
// kernel: tpu_custom_call.1
$region0: #{tpu_custom_call.1}
  #allocation0 [shape = 'u32[]', space=smem, size = 0x4, offset = 0x4, fixed_abs, tag = 'smem constant byte address 0x4 - core index']
  #allocation1 [shape = 'u32[144,128]{1,0:T(1,128)}', space=vmem, size = 0x12000, scoped, tag = 'internal scratch']
  %s0 = inlined_call_operand.hbm [shape: f32[1,8,32], index: 0, kind: input, shape index: {}]
  %s1 = inlined_call_operand.hbm [shape: f32[1,32,128], index: 1, kind: input, shape index: {}]
  %s2 = inlined_call_operand.vmem [shape: f32[1,1,128], index: 2, kind: input, shape index: {}]
  %s3 = inlined_call_operand.hbm [shape: f32[1,8,128], index: 3, kind: output, shape index: {}]
  %s4 = sld [smem:[#allocation0]]
  $region30: #{tpu_custom_call.1} parent=0
    _
  %s6 = ssub.s32 1, %s4
  %s7 = scalar_select 0, %s6, %s4
  $region1: #{tpu_custom_call.1} parent=0
    #allocation2 [shape = 'u8[4096]{0}', space=vmem, size = 0x1000, scoped, tag = 'input window, operand 0, single buffered']
    #allocation3 [shape = 's32[1]{0}', space=sflag, size = 0x4, scoped, tag = 'scoped memory for tpu_custom_call.1']
    #allocation4 [shape = 's32[1]{0}', space=sflag, size = 0x4, scoped, tag = 'scoped memory for tpu_custom_call.1']
    #allocation5 [shape = 'u8[16384]{0}', space=vmem, size = 0x4000, scoped, tag = 'input window, operand 1, single buffered']
    #allocation6 [shape = 's32[1]{0}', space=sflag, size = 0x4, scoped, tag = 'scoped memory for tpu_custom_call.1']
    #allocation7 [shape = 'u8[4096]{0}', space=vmem, size = 0x1000, scoped, tag = 'output window, operand 0, single buffered']
    %8 = vsyncpa [#allocation3], 0
    %9 = vsyncpa [#allocation6], 0
    %10 = vsyncpa [#allocation4], 0
    // Predicated region
    $region2: #{tpu_custom_call.1} parent=1 // pred_check
      _
    $region3: #{tpu_custom_call.1} parent=1 // pred_check_branch
      %12 = sbr.rel (0) target = $region5
    $region4: #{tpu_custom_call.1} parent=1 // pred_region
      %s14 = ssub.s32 128, 128
      %15 = vsyncadd [#allocation3], %s14
      %s17 = sshll.u32 [#allocation2], 4
      %s18 = int_to_ptr.vmem [resolvable:$true] %s17
      %20 = dma.hbm_to_vmem [thread:$0]  %s0, 128, %s18, [#allocation3]
    $region5: #{tpu_custom_call.1} parent=1 // pred_fallthru
      _
    // Predicated region
    $region6: #{tpu_custom_call.1} parent=1 // pred_check
      _
    $region7: #{tpu_custom_call.1} parent=1 // pred_check_branch
      %22 = sbr.rel (0) target = $region9
    $region8: #{tpu_custom_call.1} parent=1 // pred_region
      %s24 = ssub.s32 512, 512
      %25 = vsyncadd [#allocation6], %s24
      %s26 = sshll.u32 [#allocation5], 4
      %s27 = int_to_ptr.vmem [resolvable:$true] %s26
      %32 = dma.hbm_to_vmem [thread:$0]  %s1, 512, %s27, [#allocation6], 128, 128, 8
    $region9: #{tpu_custom_call.1} parent=1 // pred_fallthru
      _
    // Predicated region
    $region10: #{tpu_custom_call.1} parent=1 // pred_check
      _
    $region11: #{tpu_custom_call.1} parent=1 // pred_check_branch
      %34 = sbr.rel (0) target = $region13
    $region12: #{tpu_custom_call.1} parent=1 // pred_region
      _
    $region13: #{tpu_custom_call.1} parent=1 // pred_fallthru
      _
    // Predicated region
    $region14: #{tpu_custom_call.1} parent=1 // pred_check
      _
    $region15: #{tpu_custom_call.1} parent=1 // pred_check_branch
      %36 = sbr.rel (0) target = $region17
    $region16: #{tpu_custom_call.1} parent=1 // pred_region
      %37 = dma.done [#allocation3], 128
    $region17: #{tpu_custom_call.1} parent=1 // pred_fallthru
      _
    // Predicated region
    $region18: #{tpu_custom_call.1} parent=1 // pred_check
      _
    $region19: #{tpu_custom_call.1} parent=1 // pred_check_branch
      %39 = sbr.rel (0) target = $region21
    $region20: #{tpu_custom_call.1} parent=1 // pred_region
      %40 = dma.done [#allocation6], 512
    $region21: #{tpu_custom_call.1} parent=1 // pred_fallthru
      _
    %v41 = vld [vmem:[#allocation2] sm:$0xff]
    %v42 = vld [vmem:[#allocation5] sm:$0xff]
    %v43 = vld [vmem:[#allocation5 + $0x8] sm:$0xff]
    %v44 = vld [vmem:[#allocation5 + $0x10] sm:$0xff]
    %v45 = vld [vmem:[#allocation5 + $0x18] sm:$0xff]
    %v46 = vld [vmem:[%s2] sm:$0x1]
    %v48 = vlaneseq
    %v49 = vshrl.u32 %v48, 7
    %v50 = vsub.s32 0, %v49
    %v51 = vrot.slane %v46, %v50
    %vm53 = vcmask 261120
    %v55 = vsel %vm53, %v41, 0
    %57 = vmatprep.subr.mxu0 0.0
    %58 = vmatpush1.msra.mxu0 %v42
    %59 = vmatprep.subr.mxu0 0.0
    %60 = vmatpush1.msra.mxu0 %v43
    %61 = vmatprep.subr.mxu0 0.0
    %62 = vmatpush1.msra.mxu0 %v44
    %63 = vmatprep.subr.mxu0 0.0
    %64 = vmatpush1.msra.mxu0 %v45
    %65 = vmatprep.subr.mxu0 0.0
    %66 = vmatpush1.msra.mxu0 0.0
    %67 = vmatprep.subr.mxu0 0.0
    %68 = vmatpush1.msra.mxu0 0.0
    %69 = vmatprep.subr.mxu0 0.0
    %70 = vmatpush1.msra.mxu0 0.0
    %71 = vmatprep.subr.mxu0 0.0
    %72 = vmatpush1.msra.mxu0 0.0
    %73 = vmatprep.subr.mxu0 0.0
    %74 = vmatpush1.msra.mxu0 0.0
    %75 = vmatprep.subr.mxu0 0.0
    %76 = vmatpush1.msra.mxu0 0.0
    %77 = vmatprep.subr.mxu0 0.0
    %78 = vmatpush1.msra.mxu0 0.0
    %79 = vmatprep.subr.mxu0 0.0
    %80 = vmatpush1.msra.mxu0 0.0
    %81 = vmatprep.subr.mxu0 0.0
    %82 = vmatpush1.msra.mxu0 0.0
    %83 = vmatprep.subr.mxu0 0.0
    %84 = vmatpush1.msra.mxu0 0.0
    %85 = vmatprep.subr.mxu0 0.0
    %86 = vmatpush1.msra.mxu0 0.0
    %87 = vmatprep.subr.mxu0 0.0
    %88 = vmatpush1.msra.mxu0 0.0
    %89 = vmatprep.subr.mxu0 0.0
    %90 = vmatpush1.msra.mxu0 0.0
    %91 = vmatprep.subr.mxu0 0.0
    %92 = vmatpush1.msra.mxu0 0.0
    %93 = vmatprep.subr.mxu0 0.0
    %94 = vmatpush1.msra.mxu0 0.0
    %95 = vmatprep.subr.mxu0 0.0
    %96 = vmatpush1.msra.mxu0 0.0
    %97 = vmatprep.subr.mxu0 0.0
    %98 = vmatpush1.msra.mxu0 0.0
    %99 = vmatprep.subr.mxu0 0.0
    %100 = vmatpush1.msra.mxu0 0.0
    %101 = vmatprep.subr.mxu0 0.0
    %102 = vmatpush1.msra.mxu0 0.0
    %103 = vmatprep.subr.mxu0 0.0
    %104 = vmatpush1.msra.mxu0 0.0
    %105 = vmatprep.subr.mxu0 0.0
    %106 = vmatpush1.msra.mxu0 0.0
    %107 = vmatprep.subr.mxu0 0.0
    %108 = vmatpush1.msra.mxu0 0.0
    %109 = vmatprep.subr.mxu0 0.0
    %110 = vmatpush1.msra.mxu0 0.0
    %111 = vmatprep.subr.mxu0 0.0
    %112 = vmatpush1.msra.mxu0 0.0
    %113 = vmatprep.subr.mxu0 0.0
    %114 = vmatpush1.msra.mxu0 0.0
    %115 = vmatprep.subr.mxu0 0.0
    %116 = vmatpush1.msra.mxu0 0.0
    %117 = vmatprep.subr.mxu0 0.0
    %118 = vmatpush1.msra.mxu0 0.0
    %119 = vmatprep.subr.mxu0 0.0
    %120 = vmatpush1.msra.mxu0 0.0
    %121 = vmatprep.mubr.f32.mxu0 0.0
    %122 = vmatmul.mubr.f32.gmra.mrb[0].mxu0 %v55
    %v123 = vpop.f32.mrb[0].mxu0
    %v124 = vadd.f32 %v51, %v123
    %v125 = vpop.f32.mrb[0].mxu0
    %126 = vdwg.mxu0
    %127 = vst [vmem:[#allocation7] sm:$0xff] %v124
    // Predicated region
    $region22: #{tpu_custom_call.1} parent=1 // pred_check
      _
    $region23: #{tpu_custom_call.1} parent=1 // pred_check_branch
      %129 = sbr.rel (0) target = $region25
    $region24: #{tpu_custom_call.1} parent=1 // pred_region
      %s131 = ssub.s32 128, 128
      %132 = vsyncadd [#allocation4], %s131
      %s134 = sshll.u32 [#allocation7], 4
      %s135 = int_to_ptr.vmem [resolvable:$true] %s134
      %137 = dma.vmem_to_hbm [thread:$0]  %s135, 128, %s3, [#allocation4]
    $region25: #{tpu_custom_call.1} parent=1 // pred_fallthru
      _
    // Predicated region
    $region26: #{tpu_custom_call.1} parent=1 // pred_check
      _
    $region27: #{tpu_custom_call.1} parent=1 // pred_check_branch
      %139 = sbr.rel (0) target = $region29
    $region28: #{tpu_custom_call.1} parent=1 // pred_region
      %140 = dma.done [#allocation4], 128
    $region29: #{tpu_custom_call.1} parent=1 // pred_fallthru
      _
    %141 = vsyncpa [#allocation3], 1
    %142 = vsyncpa [#allocation6], 1
    %143 = vsyncpa [#allocation4], 1

</llo_original>
